<compile_context>
chip_gen: v6e
topology: v6e:2x2x1
jax: 0.10.0
libtpu: 0.0.40
codegen_flags: <defaults>
</compile_context>

<pallas_src>
import functools

import jax
import jax.numpy as jnp
import numpy as np
from jax import lax
from jax.experimental import pallas as pl
from jax.experimental.pallas import tpu as pltpu


def _residual_block_kernel(x_ref, w1_ref, b1_ref, w2_ref, b2_ref, mask_ref,
                           o_ref, pad_ref, *, WP, OFF, L_AL):
    """Whole residual block in one grid step.

    Layout: rows (sublanes) = n*C + c ; lanes = flat "slab" coordinate j = y*WP + x
    (WP = W+2 padded row width).  Column OFF + j of x_ref / pad_ref holds the value
    at padded-image position j + WP + 1 (= the centre pixel of output j), so tap
    (dy, dx) of the 3x3 conv is the lane-shifted view starting at OFF + dy*WP + dx.

    x_ref   : (NC, BW)    f32  padded input, slab-aligned (exact zeros outside image)
    w1_ref  : (NC, 9*NC)  f32  conv1 taps, block-diag over batch, BN1 scale folded in
    b1_ref  : (NC, 1)     f32  BN1 bias (per output row)
    w2_ref  : (NC, 9*NC)  f32  conv2 taps, BN2 scale folded in
    b2_ref  : (NC, 1)     f32  BN2 bias
    mask_ref: (1, L_AL)   f32  1.0 on valid slab lanes, 0.0 on halo / out-of-range
    o_ref   : (NC, L_AL)  f32  output slab (wrapper extracts the H*W interior)
    pad_ref : (NC, BW)    f32  scratch: zero-padded conv1 activation for conv2
    """
    shifts = [dy * WP + dx for dy in (-1, 0, 1) for dx in (-1, 0, 1)]

    def conv3x3(src_ref, w_ref):
        # im2col: 9 lane-shifted (NC, L_AL) views stacked on sublanes -> (9*NC, L_AL);
        # one fused matmul per conv, register result (no accumulator RMW scratch).
        cols = jnp.concatenate(
            [src_ref[:, OFF + s:OFF + s + L_AL] for s in shifts], axis=0)
        return jnp.dot(w_ref[...], cols, preferred_element_type=jnp.float32)

    # ---- conv1 (BN1 scale pre-folded) -> bias -> ReLU -> zero halo/garbage lanes ----
    h = conv3x3(x_ref, w1_ref)
    h = jnp.maximum(h + b1_ref[...], 0.0) * mask_ref[...]

    # ---- stage h as a zero-padded image for conv2 (both stores lane-aligned) --------
    pad_ref[...] = jnp.zeros_like(pad_ref)
    pad_ref[:, OFF:OFF + L_AL] = h

    # ---- conv2 (BN2 scale pre-folded) -> bias ----------------------------------------
    y = conv3x3(pad_ref, w2_ref) + b2_ref[...]

    # ---- residual add + ReLU: single dense, unmasked (NC, L_AL) store ----------------
    o_ref[...] = jnp.maximum(x_ref[:, OFF:OFF + L_AL] + y, 0.0)


def residual_block_pallas(x_nchw, w1_oihw, w2_oihw, sb1, sb2):
    """x_nchw: (N, C, H, W) f32; w*_oihw: (C_out, C_in, 3, 3) f32 (PyTorch layout);
    sb*: (2, C) f32 with row0 = folded BN scale, row1 = folded BN bias."""
    N, C, H, W = x_nchw.shape
    NC = N * C
    HP, WP = H + 2, W + 2
    HALO = WP + 1                                   # max |tap shift| in slab coords
    L = H * WP                                      # slab length covering all outputs
    L_AL = ((L + 127) // 128) * 128                 # lane-dense slab width
    OFF = ((HALO + 127) // 128) * 128               # aligned slab origin inside buffers
    BW = ((OFF + L_AL + HALO + 127) // 128) * 128   # padded buffer width

    f32 = jnp.float32
    x = x_nchw.astype(f32)

    # Input: 1-pixel zero pad, flatten (N, C) onto sublanes and (HP, WP) onto lanes,
    # then place the padded image so that slab lane j sits at column OFF + j.
    x_pad = jnp.pad(x, ((0, 0), (0, 0), (1, 1), (1, 1))).reshape(NC, HP * WP)
    left = OFF - HALO
    x_buf = jnp.pad(x_pad, ((0, 0), (left, BW - left - HP * WP)))

    # Weights: fold BN scale into output channels, per-tap (C_out, C_in) matrices,
    # block-diagonal over the batch, taps concatenated -> (NC, 9*NC).
    def make_wbig(w_oihw, scale):
        w = w_oihw.astype(f32) * scale.astype(f32)[:, None, None, None]
        eye = jnp.eye(N, dtype=f32)
        taps = [jnp.kron(eye, w[:, :, ky, kx])
                for ky in range(3) for kx in range(3)]
        return jnp.concatenate(taps, axis=1)

    w1_big = make_wbig(w1_oihw, sb1[0])
    w2_big = make_wbig(w2_oihw, sb2[0])
    b1 = jnp.tile(sb1[1].astype(f32), N).reshape(NC, 1)
    b2 = jnp.tile(sb2[1].astype(f32), N).reshape(NC, 1)

    # Valid-lane mask: slab lane j is a real pixel iff (j % WP) < W and j < H*WP.
    j = jnp.arange(L_AL)
    mask = (((j % WP) < W) & (j < L)).astype(f32).reshape(1, L_AL)

    kernel = functools.partial(_residual_block_kernel, WP=WP, OFF=OFF, L_AL=L_AL)

    flops = 4 * 9 * N * H * W * C * C               # 2 convs x 2 flops/MAC x 9 taps
    bytes_accessed = 4 * (x_buf.size + w1_big.size + w2_big.size + b1.size
                          + b2.size + mask.size + NC * L_AL)

    out_slab = pl.pallas_call(
        kernel,
        out_shape=jax.ShapeDtypeStruct((NC, L_AL), f32),
        grid=(1,),
        in_specs=[
            pl.BlockSpec((NC, BW), lambda i: (0, 0)),
            pl.BlockSpec((NC, 9 * NC), lambda i: (0, 0)),
            pl.BlockSpec((NC, 1), lambda i: (0, 0)),
            pl.BlockSpec((NC, 9 * NC), lambda i: (0, 0)),
            pl.BlockSpec((NC, 1), lambda i: (0, 0)),
            pl.BlockSpec((1, L_AL), lambda i: (0, 0)),
        ],
        out_specs=pl.BlockSpec((NC, L_AL), lambda i: (0, 0)),
        scratch_shapes=[pltpu.VMEM((NC, BW), f32)],
        compiler_params=pltpu.CompilerParams(
            dimension_semantics=("arbitrary",)),
        cost_estimate=pl.CostEstimate(flops=flops, transcendentals=0,
                                      bytes_accessed=bytes_accessed),
    )(x_buf, w1_big, b1, w2_big, b2, mask)

    # Slab lane j = y*WP + x  ->  (N, C, H, W).
    return out_slab[:, :L].reshape(N, C, H, WP)[:, :, :, :W]


def _fold_bn(gamma, beta, mean, var, eps=1e-5):
    scale = gamma / jnp.sqrt(var + eps)
    bias = beta - mean * scale
    return jnp.stack([scale, bias], axis=0)  # (2, C)


def _reference(x_nchw, w1_oihw, w2_oihw, sb1, sb2):
    """Pure-JAX reference (lax conv, NCHW, f32) for validation."""
    def conv(x, w):
        return lax.conv_general_dilated(
            x, w, window_strides=(1, 1), padding="SAME",
            dimension_numbers=("NCHW", "OIHW", "NCHW"))
    h = conv(x_nchw, w1_oihw)
    h = h * sb1[0][None, :, None, None] + sb1[1][None, :, None, None]
    h = jnp.maximum(h, 0.0)
    y = conv(h, w2_oihw)
    y = y * sb2[0][None, :, None, None] + sb2[1][None, :, None, None]
    return jnp.maximum(x_nchw + y, 0.0)


if __name__ == "__main__":
    N, C, H, W = 2, 4, 16, 16

    key = jax.random.PRNGKey(0)
    kx, kw1, kw2, kg1, kb1, km1, kv1, kg2, kb2, km2, kv2 = jax.random.split(key, 11)

    x = jax.random.normal(kx, (N, C, H, W), jnp.float32)

    # Conv weights in PyTorch OIHW layout.
    w1_oihw = jax.random.normal(kw1, (C, C, 3, 3), jnp.float32) * 0.1
    w2_oihw = jax.random.normal(kw2, (C, C, 3, 3), jnp.float32) * 0.1

    # BatchNorm parameters / running stats (inference mode).
    g1 = 1.0 + 0.1 * jax.random.normal(kg1, (C,), jnp.float32)
    b1 = 0.1 * jax.random.normal(kb1, (C,), jnp.float32)
    m1 = 0.1 * jax.random.normal(km1, (C,), jnp.float32)
    v1 = 1.0 + 0.1 * jax.nn.softplus(jax.random.normal(kv1, (C,), jnp.float32))
    g2 = 1.0 + 0.1 * jax.random.normal(kg2, (C,), jnp.float32)
    b2 = 0.1 * jax.random.normal(kb2, (C,), jnp.float32)
    m2 = 0.1 * jax.random.normal(km2, (C,), jnp.float32)
    v2 = 1.0 + 0.1 * jax.nn.softplus(jax.random.normal(kv2, (C,), jnp.float32))

    sb1 = _fold_bn(g1, b1, m1, v1)
    sb2 = _fold_bn(g2, b2, m2, v2)

    out = residual_block_pallas(x, w1_oihw, w2_oihw, sb1, sb2)
    out = jax.block_until_ready(out)

    ref = _reference(x, w1_oihw, w2_oihw, sb1, sb2)
    # Tolerance covers MXU default-precision f32 matmuls (bf16 passes).
    np.testing.assert_allclose(np.asarray(out), np.asarray(ref),
                               rtol=2e-2, atol=2e-2)

    print("KERNEL_OK")
</pallas_src>

<mosaic_0001>
module attributes {stable_mosaic.version = 11 : i64} {
  func.func @_residual_block_kernel(%arg0: i32, %arg1: memref<8x640xf32, #tpu.memory_space<vmem>>, %arg2: memref<8x72xf32, #tpu.memory_space<vmem>>, %arg3: memref<8x1xf32, #tpu.memory_space<vmem>>, %arg4: memref<8x72xf32, #tpu.memory_space<vmem>>, %arg5: memref<8x1xf32, #tpu.memory_space<vmem>>, %arg6: memref<1x384xf32, #tpu.memory_space<vmem>>, %arg7: memref<8x384xf32, #tpu.memory_space<vmem>>, %arg8: memref<8x640xf32, #tpu.memory_space<vmem>>) attributes {dimension_semantics = [#tpu.dimension_semantics<arbitrary>], iteration_bounds = array<i64: 1>, scalar_prefetch = 0 : i64, scratch_operands = 1 : i64, tpu.core_type = #tpu.core_type<tc>, window_params = [{pipeline_mode = #tpu.pipeline_mode<synchronous>, transform_indices = @transform_0, window_bounds = array<i64: 8, 640>}, {pipeline_mode = #tpu.pipeline_mode<synchronous>, transform_indices = @transform_1, window_bounds = array<i64: 8, 72>}, {pipeline_mode = #tpu.pipeline_mode<synchronous>, transform_indices = @transform_2, window_bounds = array<i64: 8, 1>}, {pipeline_mode = #tpu.pipeline_mode<synchronous>, transform_indices = @transform_3, window_bounds = array<i64: 8, 72>}, {pipeline_mode = #tpu.pipeline_mode<synchronous>, transform_indices = @transform_4, window_bounds = array<i64: 8, 1>}, {pipeline_mode = #tpu.pipeline_mode<synchronous>, transform_indices = @transform_5, window_bounds = array<i64: 1, 384>}, {pipeline_mode = #tpu.pipeline_mode<synchronous>, transform_indices = @transform_6, window_bounds = array<i64: 8, 384>}]} {
    %c0 = arith.constant 0 : index
    %c109 = arith.constant 109 : index
    %0 = vector.load %arg1[%c0, %c109] : memref<8x640xf32, #tpu.memory_space<vmem>>, vector<8x384xf32>
    %c0_0 = arith.constant 0 : index
    %c110 = arith.constant 110 : index
    %1 = vector.load %arg1[%c0_0, %c110] : memref<8x640xf32, #tpu.memory_space<vmem>>, vector<8x384xf32>
    %c0_1 = arith.constant 0 : index
    %c111 = arith.constant 111 : index
    %2 = vector.load %arg1[%c0_1, %c111] : memref<8x640xf32, #tpu.memory_space<vmem>>, vector<8x384xf32>
    %c0_2 = arith.constant 0 : index
    %c127 = arith.constant 127 : index
    %3 = vector.load %arg1[%c0_2, %c127] : memref<8x640xf32, #tpu.memory_space<vmem>>, vector<8x384xf32>
    %c0_3 = arith.constant 0 : index
    %c128 = arith.constant 128 : index
    %4 = vector.load %arg1[%c0_3, %c128] : memref<8x640xf32, #tpu.memory_space<vmem>>, vector<8x384xf32>
    %c0_4 = arith.constant 0 : index
    %c129 = arith.constant 129 : index
    %5 = vector.load %arg1[%c0_4, %c129] : memref<8x640xf32, #tpu.memory_space<vmem>>, vector<8x384xf32>
    %c0_5 = arith.constant 0 : index
    %c145 = arith.constant 145 : index
    %6 = vector.load %arg1[%c0_5, %c145] : memref<8x640xf32, #tpu.memory_space<vmem>>, vector<8x384xf32>
    %c0_6 = arith.constant 0 : index
    %c146 = arith.constant 146 : index
    %7 = vector.load %arg1[%c0_6, %c146] : memref<8x640xf32, #tpu.memory_space<vmem>>, vector<8x384xf32>
    %c0_7 = arith.constant 0 : index
    %c147 = arith.constant 147 : index
    %8 = vector.load %arg1[%c0_7, %c147] : memref<8x640xf32, #tpu.memory_space<vmem>>, vector<8x384xf32>
    %9 = tpu.concatenate %0, %1, %2, %3, %4, %5, %6, %7, %8 in 0 : vector<8x384xf32>, vector<8x384xf32>, vector<8x384xf32>, vector<8x384xf32>, vector<8x384xf32>, vector<8x384xf32>, vector<8x384xf32>, vector<8x384xf32>, vector<8x384xf32> -> vector<72x384xf32>
    %c0_8 = arith.constant 0 : index
    %c0_9 = arith.constant 0 : index
    %10 = vector.load %arg2[%c0_8, %c0_9] : memref<8x72xf32, #tpu.memory_space<vmem>>, vector<8x72xf32>
    %cst = arith.constant dense<0.000000e+00> : vector<8x384xf32>
    %11 = tpu.matmul %10, %9, %cst {dimension_numbers = #tpu.dot_dimension_numbers<[1], [0], [0], [1], [0, 0, 1, 1], [], []>} : vector<8x72xf32>, vector<72x384xf32>, vector<8x384xf32> -> vector<8x384xf32>
    %c0_10 = arith.constant 0 : index
    %c0_11 = arith.constant 0 : index
    %12 = vector.load %arg3[%c0_10, %c0_11] : memref<8x1xf32, #tpu.memory_space<vmem>>, vector<8x1xf32>
    %13 = vector.broadcast %12 : vector<8x1xf32> to vector<8x384xf32>
    %14 = arith.addf %11, %13 : vector<8x384xf32>
    %cst_12 = arith.constant 0.000000e+00 : f32
    %15 = vector.broadcast %cst_12 : f32 to vector<8x384xf32>
    %16 = arith.maximumf %14, %15 : vector<8x384xf32>
    %c0_13 = arith.constant 0 : index
    %c0_14 = arith.constant 0 : index
    %17 = vector.load %arg6[%c0_13, %c0_14] : memref<1x384xf32, #tpu.memory_space<vmem>>, vector<1x384xf32>
    %18 = vector.broadcast %17 : vector<1x384xf32> to vector<8x384xf32>
    %19 = arith.mulf %16, %18 : vector<8x384xf32>
    %cst_15 = arith.constant 0.000000e+00 : f32
    %20 = vector.broadcast %cst_15 : f32 to vector<8x640xf32>
    %c0_16 = arith.constant 0 : index
    %c0_17 = arith.constant 0 : index
    %21 = vector.load %arg8[%c0_16, %c0_17] : memref<8x640xf32, #tpu.memory_space<vmem>>, vector<8x640xf32>
    tpu.vector_store %arg8[%c0_16, %c0_17], %20 {strides = array<i32>} : memref<8x640xf32, #tpu.memory_space<vmem>>, vector<8x640xf32>,
    %c0_18 = arith.constant 0 : index
    %c128_19 = arith.constant 128 : index
    %22 = vector.load %arg8[%c0_18, %c128_19] : memref<8x640xf32, #tpu.memory_space<vmem>>, vector<8x384xf32>
    tpu.vector_store %arg8[%c0_18, %c128_19], %19 {strides = array<i32>} : memref<8x640xf32, #tpu.memory_space<vmem>>, vector<8x384xf32>,
    %c0_20 = arith.constant 0 : index
    %c109_21 = arith.constant 109 : index
    %23 = vector.load %arg8[%c0_20, %c109_21] : memref<8x640xf32, #tpu.memory_space<vmem>>, vector<8x384xf32>
    %c0_22 = arith.constant 0 : index
    %c110_23 = arith.constant 110 : index
    %24 = vector.load %arg8[%c0_22, %c110_23] : memref<8x640xf32, #tpu.memory_space<vmem>>, vector<8x384xf32>
    %c0_24 = arith.constant 0 : index
    %c111_25 = arith.constant 111 : index
    %25 = vector.load %arg8[%c0_24, %c111_25] : memref<8x640xf32, #tpu.memory_space<vmem>>, vector<8x384xf32>
    %c0_26 = arith.constant 0 : index
    %c127_27 = arith.constant 127 : index
    %26 = vector.load %arg8[%c0_26, %c127_27] : memref<8x640xf32, #tpu.memory_space<vmem>>, vector<8x384xf32>
    %c0_28 = arith.constant 0 : index
    %c128_29 = arith.constant 128 : index
    %27 = vector.load %arg8[%c0_28, %c128_29] : memref<8x640xf32, #tpu.memory_space<vmem>>, vector<8x384xf32>
    %c0_30 = arith.constant 0 : index
    %c129_31 = arith.constant 129 : index
    %28 = vector.load %arg8[%c0_30, %c129_31] : memref<8x640xf32, #tpu.memory_space<vmem>>, vector<8x384xf32>
    %c0_32 = arith.constant 0 : index
    %c145_33 = arith.constant 145 : index
    %29 = vector.load %arg8[%c0_32, %c145_33] : memref<8x640xf32, #tpu.memory_space<vmem>>, vector<8x384xf32>
    %c0_34 = arith.constant 0 : index
    %c146_35 = arith.constant 146 : index
    %30 = vector.load %arg8[%c0_34, %c146_35] : memref<8x640xf32, #tpu.memory_space<vmem>>, vector<8x384xf32>
    %c0_36 = arith.constant 0 : index
    %c147_37 = arith.constant 147 : index
    %31 = vector.load %arg8[%c0_36, %c147_37] : memref<8x640xf32, #tpu.memory_space<vmem>>, vector<8x384xf32>
    %32 = tpu.concatenate %23, %24, %25, %26, %27, %28, %29, %30, %31 in 0 : vector<8x384xf32>, vector<8x384xf32>, vector<8x384xf32>, vector<8x384xf32>, vector<8x384xf32>, vector<8x384xf32>, vector<8x384xf32>, vector<8x384xf32>, vector<8x384xf32> -> vector<72x384xf32>
    %c0_38 = arith.constant 0 : index
    %c0_39 = arith.constant 0 : index
    %33 = vector.load %arg4[%c0_38, %c0_39] : memref<8x72xf32, #tpu.memory_space<vmem>>, vector<8x72xf32>
    %cst_40 = arith.constant dense<0.000000e+00> : vector<8x384xf32>
    %34 = tpu.matmul %33, %32, %cst_40 {dimension_numbers = #tpu.dot_dimension_numbers<[1], [0], [0], [1], [0, 0, 1, 1], [], []>} : vector<8x72xf32>, vector<72x384xf32>, vector<8x384xf32> -> vector<8x384xf32>
    %c0_41 = arith.constant 0 : index
    %c0_42 = arith.constant 0 : index
    %35 = vector.load %arg5[%c0_41, %c0_42] : memref<8x1xf32, #tpu.memory_space<vmem>>, vector<8x1xf32>
    %36 = vector.broadcast %35 : vector<8x1xf32> to vector<8x384xf32>
    %37 = arith.addf %34, %36 : vector<8x384xf32>
    %c0_43 = arith.constant 0 : index
    %c128_44 = arith.constant 128 : index
    %38 = vector.load %arg1[%c0_43, %c128_44] : memref<8x640xf32, #tpu.memory_space<vmem>>, vector<8x384xf32>
    %39 = arith.addf %38, %37 : vector<8x384xf32>
    %cst_45 = arith.constant 0.000000e+00 : f32
    %40 = vector.broadcast %cst_45 : f32 to vector<8x384xf32>
    %41 = arith.maximumf %39, %40 : vector<8x384xf32>
    %c0_46 = arith.constant 0 : index
    %c0_47 = arith.constant 0 : index
    %42 = vector.load %arg7[%c0_46, %c0_47] : memref<8x384xf32, #tpu.memory_space<vmem>>, vector<8x384xf32>
    tpu.vector_store %arg7[%c0_46, %c0_47], %41 {strides = array<i32>} : memref<8x384xf32, #tpu.memory_space<vmem>>, vector<8x384xf32>,
    return
  }
  func.func @transform_0(%arg0: i32) -> (i32, i32) {
    %c0_i32 = arith.constant 0 : i32
    %c0_i32_0 = arith.constant 0 : i32
    %c0_i32_1 = arith.constant 0 : i32
    return %c0_i32, %c0_i32_0 : i32, i32
  }
  func.func @transform_1(%arg0: i32) -> (i32, i32) {
    %c0_i32 = arith.constant 0 : i32
    %c0_i32_0 = arith.constant 0 : i32
    %c0_i32_1 = arith.constant 0 : i32
    return %c0_i32, %c0_i32_0 : i32, i32
  }
  func.func @transform_2(%arg0: i32) -> (i32, i32) {
    %c0_i32 = arith.constant 0 : i32
    %c0_i32_0 = arith.constant 0 : i32
    %c0_i32_1 = arith.constant 0 : i32
    return %c0_i32, %c0_i32_0 : i32, i32
  }
  func.func @transform_3(%arg0: i32) -> (i32, i32) {
    %c0_i32 = arith.constant 0 : i32
    %c0_i32_0 = arith.constant 0 : i32
    %c0_i32_1 = arith.constant 0 : i32
    return %c0_i32, %c0_i32_0 : i32, i32
  }
  func.func @transform_4(%arg0: i32) -> (i32, i32) {
    %c0_i32 = arith.constant 0 : i32
    %c0_i32_0 = arith.constant 0 : i32
    %c0_i32_1 = arith.constant 0 : i32
    return %c0_i32, %c0_i32_0 : i32, i32
  }
  func.func @transform_5(%arg0: i32) -> (i32, i32) {
    %c0_i32 = arith.constant 0 : i32
    %c0_i32_0 = arith.constant 0 : i32
    %c0_i32_1 = arith.constant 0 : i32
    return %c0_i32, %c0_i32_0 : i32, i32
  }
  func.func @transform_6(%arg0: i32) -> (i32, i32) {
    %c0_i32 = arith.constant 0 : i32
    %c0_i32_0 = arith.constant 0 : i32
    %c0_i32_1 = arith.constant 0 : i32
    return %c0_i32, %c0_i32_0 : i32, i32
  }
}

</mosaic_0001>

<llo_original>
// kernel: tpu_custom_call.1
$region0: #{tpu_custom_call.1}
  #allocation0 [shape = 'u32[]', space=smem, size = 0x4, offset = 0x4, fixed_abs, tag = 'smem constant byte address 0x4 - core index']
  #allocation1 [shape = 'u32[144,128]{1,0:T(1,128)}', space=vmem, size = 0x12000, scoped, tag = 'internal scratch']
  #allocation2 [shape = 'f32[8,640]{1,0:T(8,128)}', space=vmem, size = 0x5000, scoped, tag = 'scratch operand']
  %s0 = inlined_call_operand.hbm [shape: f32[8,640], index: 0, kind: input, shape index: {}]
  %s1 = inlined_call_operand.vmem [shape: f32[8,72], index: 1, kind: input, shape index: {}]
  %s2 = inlined_call_operand.vmem [shape: f32[8,1], index: 2, kind: input, shape index: {}]
  %s3 = inlined_call_operand.vmem [shape: f32[8,72], index: 3, kind: input, shape index: {}]
  %s4 = inlined_call_operand.vmem [shape: f32[8,1], index: 4, kind: input, shape index: {}]
  %s5 = inlined_call_operand.vmem [shape: f32[1,384], index: 5, kind: input, shape index: {}]
  %s6 = inlined_call_operand.hbm [shape: f32[8,384], index: 6, kind: output, shape index: {}]
  %s7 = sld [smem:[#allocation0]]
  $region38: #{tpu_custom_call.1} parent=0
    _
  %s9 = ssub.s32 1, %s7
  %s10 = scalar_select 0, %s9, %s7
  $region1: #{tpu_custom_call.1} parent=0
    #allocation3 [shape = 'u8[20480]{0}', space=vmem, size = 0x5000, scoped, tag = 'input window, operand 0, single buffered']
    #allocation4 [shape = 's32[1]{0}', space=sflag, size = 0x4, scoped, tag = 'scoped memory for tpu_custom_call.1']
    #allocation5 [shape = 's32[1]{0}', space=sflag, size = 0x4, scoped, tag = 'scoped memory for tpu_custom_call.1']
    #allocation6 [shape = 'u8[12288]{0}', space=vmem, size = 0x3000, scoped, tag = 'output window, operand 0, single buffered']
    %11 = vsyncpa [#allocation4], 0
    %12 = vsyncpa [#allocation5], 0
    // Predicated region
    $region2: #{tpu_custom_call.1} parent=1 // pred_check
      _
    $region3: #{tpu_custom_call.1} parent=1 // pred_check_branch
      %14 = sbr.rel (0) target = $region5
    $region4: #{tpu_custom_call.1} parent=1 // pred_region
      %s16 = ssub.s32 640, 640
      %17 = vsyncadd [#allocation4], %s16
      %s19 = sshll.u32 [#allocation3], 4
      %s20 = int_to_ptr.vmem [resolvable:$true] %s19
      %22 = dma.hbm_to_vmem [thread:$0]  %s0, 640, %s20, [#allocation4]
    $region5: #{tpu_custom_call.1} parent=1 // pred_fallthru
      _
    // Predicated region
    $region6: #{tpu_custom_call.1} parent=1 // pred_check
      _
    $region7: #{tpu_custom_call.1} parent=1 // pred_check_branch
      %24 = sbr.rel (0) target = $region9
    $region8: #{tpu_custom_call.1} parent=1 // pred_region
      _
    $region9: #{tpu_custom_call.1} parent=1 // pred_fallthru
      _
    // Predicated region
    $region10: #{tpu_custom_call.1} parent=1 // pred_check
      _
    $region11: #{tpu_custom_call.1} parent=1 // pred_check_branch
      %26 = sbr.rel (0) target = $region13
    $region12: #{tpu_custom_call.1} parent=1 // pred_region
      _
    $region13: #{tpu_custom_call.1} parent=1 // pred_fallthru
      _
    // Predicated region
    $region14: #{tpu_custom_call.1} parent=1 // pred_check
      _
    $region15: #{tpu_custom_call.1} parent=1 // pred_check_branch
      %28 = sbr.rel (0) target = $region17
    $region16: #{tpu_custom_call.1} parent=1 // pred_region
      _
    $region17: #{tpu_custom_call.1} parent=1 // pred_fallthru
      _
    // Predicated region
    $region18: #{tpu_custom_call.1} parent=1 // pred_check
      _
    $region19: #{tpu_custom_call.1} parent=1 // pred_check_branch
      %30 = sbr.rel (0) target = $region21
    $region20: #{tpu_custom_call.1} parent=1 // pred_region
      _
    $region21: #{tpu_custom_call.1} parent=1 // pred_fallthru
      _
    // Predicated region
    $region22: #{tpu_custom_call.1} parent=1 // pred_check
      _
    $region23: #{tpu_custom_call.1} parent=1 // pred_check_branch
      %32 = sbr.rel (0) target = $region25
    $region24: #{tpu_custom_call.1} parent=1 // pred_region
      _
    $region25: #{tpu_custom_call.1} parent=1 // pred_fallthru
      _
    // Predicated region
    $region26: #{tpu_custom_call.1} parent=1 // pred_check
      _
    $region27: #{tpu_custom_call.1} parent=1 // pred_check_branch
      %34 = sbr.rel (0) target = $region29
    $region28: #{tpu_custom_call.1} parent=1 // pred_region
      %35 = dma.done [#allocation4], 640
    $region29: #{tpu_custom_call.1} parent=1 // pred_fallthru
      _
    %v36 = vld [vmem:[#allocation3] sm:$0xff]
    %v37 = vld [vmem:[#allocation3 + $0x8] sm:$0xff]
    %v38 = vld [vmem:[#allocation3 + $0x10] sm:$0xff]
    %v39 = vld [vmem:[#allocation3 + $0x18] sm:$0xff]
    %v40 = vld [vmem:[#allocation3 + $0x8] sm:$0xff]
    %v41 = vld [vmem:[#allocation3 + $0x10] sm:$0xff]
    %v42 = vld [vmem:[#allocation3 + $0x18] sm:$0xff]
    %v43 = vld [vmem:[#allocation3 + $0x20] sm:$0xff]
    %48 = vrot.lane.b32.xlu0 %v36, 127
    %v49 = vpop.permute.xlu0 %48
    %50 = vrot.lane.b32.xlu0 %v37, 127
    %v51 = vpop.permute.xlu0 %50
    %52 = vrot.lane.b32.xlu0 %v38, 127
    %v53 = vpop.permute.xlu0 %52
    %54 = vrot.lane.b32.xlu0 %v39, 127
    %v55 = vpop.permute.xlu0 %54
    %vm56 = vcmask 1039360
    %v57 = vsel %vm56, %v49, %v51
    %v58 = vsel %vm56, %v51, %v53
    %v59 = vsel %vm56, %v53, %v55
    %60 = vrot.lane.b32.xlu0 %v36, 126
    %v61 = vpop.permute.xlu0 %60
    %62 = vrot.lane.b32.xlu0 %v37, 126
    %v63 = vpop.permute.xlu0 %62
    %64 = vrot.lane.b32.xlu0 %v38, 126
    %v65 = vpop.permute.xlu0 %64
    %66 = vrot.lane.b32.xlu0 %v39, 126
    %v67 = vpop.permute.xlu0 %66
    %vm68 = vcmask 1031168
    %v69 = vsel %vm68, %v61, %v63
    %v70 = vsel %vm68, %v63, %v65
    %v71 = vsel %vm68, %v65, %v67
    %72 = vrot.lane.b32.xlu0 %v36, 110
    %v73 = vpop.permute.xlu0 %72
    %74 = vrot.lane.b32.xlu0 %v37, 110
    %v75 = vpop.permute.xlu0 %74
    %76 = vrot.lane.b32.xlu0 %v38, 110
    %v77 = vpop.permute.xlu0 %76
    %78 = vrot.lane.b32.xlu0 %v39, 110
    %v79 = vpop.permute.xlu0 %78
    %vm80 = vcmask 900096
    %v81 = vsel %vm80, %v73, %v75
    %v82 = vsel %vm80, %v75, %v77
    %v83 = vsel %vm80, %v77, %v79
    %84 = vrot.lane.b32.xlu0 %v37, 109
    %v85 = vpop.permute.xlu0 %84
    %86 = vrot.lane.b32.xlu0 %v38, 109
    %v87 = vpop.permute.xlu0 %86
    %88 = vrot.lane.b32.xlu0 %v39, 109
    %v89 = vpop.permute.xlu0 %88
    %vm90 = vcmask 891904
    %v91 = vsel %vm90, %v85, %v87
    %v92 = vsel %vm90, %v87, %v89
    %97 = vrot.lane.b32.xlu0 %v40, 108
    %v98 = vpop.permute.xlu0 %97
    %99 = vrot.lane.b32.xlu0 %v41, 108
    %v100 = vpop.permute.xlu0 %99
    %101 = vrot.lane.b32.xlu0 %v42, 108
    %v102 = vpop.permute.xlu0 %101
    %103 = vrot.lane.b32.xlu0 %v43, 108
    %v104 = vpop.permute.xlu0 %103
    %vm105 = vcmask 883712
    %v106 = vsel %vm105, %v98, %v100
    %v107 = vsel %vm105, %v100, %v102
    %v108 = vsel %vm105, %v102, %v104
    %109 = vrot.lane.b32.xlu0 %v40, 92
    %v110 = vpop.permute.xlu0 %109
    %111 = vrot.lane.b32.xlu0 %v41, 92
    %v112 = vpop.permute.xlu0 %111
    %113 = vrot.lane.b32.xlu0 %v42, 92
    %v114 = vpop.permute.xlu0 %113
    %115 = vrot.lane.b32.xlu0 %v43, 92
    %v116 = vpop.permute.xlu0 %115
    %vm117 = vcmask 752640
    %v118 = vsel %vm117, %v110, %v112
    %v119 = vsel %vm117, %v112, %v114
    %v120 = vsel %vm117, %v114, %v116
    %121 = vrot.lane.b32.xlu0 %v40, 91
    %v122 = vpop.permute.xlu0 %121
    %123 = vrot.lane.b32.xlu0 %v41, 91
    %v124 = vpop.permute.xlu0 %123
    %125 = vrot.lane.b32.xlu0 %v42, 91
    %v126 = vpop.permute.xlu0 %125
    %127 = vrot.lane.b32.xlu0 %v43, 91
    %v128 = vpop.permute.xlu0 %127
    %vm129 = vcmask 744448
    %v130 = vsel %vm129, %v122, %v124
    %v131 = vsel %vm129, %v124, %v126
    %v132 = vsel %vm129, %v126, %v128
    %133 = vrot.lane.b32.xlu0 %v40, 90
    %v134 = vpop.permute.xlu0 %133
    %135 = vrot.lane.b32.xlu0 %v41, 90
    %v136 = vpop.permute.xlu0 %135
    %137 = vrot.lane.b32.xlu0 %v42, 90
    %v138 = vpop.permute.xlu0 %137
    %139 = vrot.lane.b32.xlu0 %v43, 90
    %v140 = vpop.permute.xlu0 %139
    %vm141 = vcmask 736256
    %v142 = vsel %vm141, %v134, %v136
    %v143 = vsel %vm141, %v136, %v138
    %v144 = vsel %vm141, %v138, %v140
    %v145 = vld [vmem:[%s1] sm:$0xff]
    %v146 = vld [vmem:[%s2] sm:$0xff]
    %148 = vset.pattern.permute.xlu0 0
    %149 = vperm.xlu0 %148, %v146
    %v150 = vpop.permute.xlu0 %149
    %152 = vrot.lane.b32.xlu0 %v36, 19
    %v153 = vpop.permute.xlu0 %152
    %154 = vrot.lane.b32.xlu0 %v37, 19
    %v155 = vpop.permute.xlu0 %154
    %156 = vrot.lane.b32.xlu0 %v38, 19
    %v157 = vpop.permute.xlu0 %156
    %158 = vrot.lane.b32.xlu0 %v39, 19
    %v159 = vpop.permute.xlu0 %158
    %160 = vrot.lane.b32.xlu0 %v57, 19
    %v161 = vpop.permute.xlu0 %160
    %162 = vrot.lane.b32.xlu0 %v58, 19
    %v163 = vpop.permute.xlu0 %162
    %164 = vrot.lane.b32.xlu0 %v59, 19
    %v165 = vpop.permute.xlu0 %164
    %166 = vrot.lane.b32.xlu0 %v55, 19
    %v167 = vpop.permute.xlu0 %166
    %168 = vrot.lane.b32.xlu0 %v69, 19
    %v169 = vpop.permute.xlu0 %168
    %170 = vrot.lane.b32.xlu0 %v70, 19
    %v171 = vpop.permute.xlu0 %170
    %172 = vrot.lane.b32.xlu0 %v71, 19
    %v173 = vpop.permute.xlu0 %172
    %174 = vrot.lane.b32.xlu0 %v67, 19
    %v175 = vpop.permute.xlu0 %174
    %176 = vrot.lane.b32.xlu0 %v81, 19
    %v177 = vpop.permute.xlu0 %176
    %178 = vrot.lane.b32.xlu0 %v82, 19
    %v179 = vpop.permute.xlu0 %178
    %180 = vrot.lane.b32.xlu0 %v83, 19
    %v181 = vpop.permute.xlu0 %180
    %182 = vrot.lane.b32.xlu0 %v79, 19
    %v183 = vpop.permute.xlu0 %182
    %184 = vrot.lane.b32.xlu0 %v85, 19
    %v185 = vpop.permute.xlu0 %184
    %186 = vrot.lane.b32.xlu0 %v91, 19
    %v187 = vpop.permute.xlu0 %186
    %188 = vrot.lane.b32.xlu0 %v92, 19
    %v189 = vpop.permute.xlu0 %188
    %190 = vrot.lane.b32.xlu0 %v89, 19
    %v191 = vpop.permute.xlu0 %190
    %192 = vrot.lane.b32.xlu0 %v98, 19
    %v193 = vpop.permute.xlu0 %192
    %194 = vrot.lane.b32.xlu0 %v106, 19
    %v195 = vpop.permute.xlu0 %194
    %196 = vrot.lane.b32.xlu0 %v107, 19
    %v197 = vpop.permute.xlu0 %196
    %198 = vrot.lane.b32.xlu0 %v108, 19
    %v199 = vpop.permute.xlu0 %198
    %200 = vrot.lane.b32.xlu0 %v110, 19
    %v201 = vpop.permute.xlu0 %200
    %202 = vrot.lane.b32.xlu0 %v118, 19
    %v203 = vpop.permute.xlu0 %202
    %204 = vrot.lane.b32.xlu0 %v119, 19
    %v205 = vpop.permute.xlu0 %204
    %206 = vrot.lane.b32.xlu0 %v120, 19
    %v207 = vpop.permute.xlu0 %206
    %208 = vrot.lane.b32.xlu0 %v122, 19
    %v209 = vpop.permute.xlu0 %208
    %210 = vrot.lane.b32.xlu0 %v130, 19
    %v211 = vpop.permute.xlu0 %210
    %212 = vrot.lane.b32.xlu0 %v131, 19
    %v213 = vpop.permute.xlu0 %212
    %214 = vrot.lane.b32.xlu0 %v132, 19
    %v215 = vpop.permute.xlu0 %214
    %216 = vrot.lane.b32.xlu0 %v134, 19
    %v217 = vpop.permute.xlu0 %216
    %218 = vrot.lane.b32.xlu0 %v142, 19
    %v219 = vpop.permute.xlu0 %218
    %220 = vrot.lane.b32.xlu0 %v143, 19
    %v221 = vpop.permute.xlu0 %220
    %222 = vrot.lane.b32.xlu0 %v144, 19
    %v223 = vpop.permute.xlu0 %222
    %vm224 = vcmask 154624
    %v225 = vsel %vm224, %v153, %v155
    %v226 = vsel %vm224, %v155, %v157
    %v227 = vsel %vm224, %v157, %v159
    %v228 = vsel %vm224, %v161, %v163
    %v229 = vsel %vm224, %v163, %v165
    %v230 = vsel %vm224, %v165, %v167
    %v231 = vsel %vm224, %v169, %v171
    %v232 = vsel %vm224, %v171, %v173
    %v233 = vsel %vm224, %v173, %v175
    %v234 = vsel %vm224, %v177, %v179
    %v235 = vsel %vm224, %v179, %v181
    %v236 = vsel %vm224, %v181, %v183
    %v237 = vsel %vm224, %v185, %v187
    %v238 = vsel %vm224, %v187, %v189
    %v239 = vsel %vm224, %v189, %v191
    %v240 = vsel %vm224, %v193, %v195
    %v241 = vsel %vm224, %v195, %v197
    %v242 = vsel %vm224, %v197, %v199
    %v243 = vsel %vm224, %v201, %v203
    %v244 = vsel %vm224, %v203, %v205
    %v245 = vsel %vm224, %v205, %v207
    %v246 = vsel %vm224, %v209, %v211
    %v247 = vsel %vm224, %v211, %v213
    %v248 = vsel %vm224, %v213, %v215
    %v249 = vsel %vm224, %v217, %v219
    %v250 = vsel %vm224, %v219, %v221
    %v251 = vsel %vm224, %v221, %v223
    %vm279 = vcmask 588800
    %v281 = vsel %vm279, %v145, 0
    %283 = vmatprep.subr.mxu0 0.0
    %284 = vmatpush1.msra.mxu0 0.0
    %285 = vmatprep.subr.mxu0 0.0
    %286 = vmatpush1.msra.mxu0 0.0
    %287 = vmatprep.subr.mxu0 0.0
    %288 = vmatpush1.msra.mxu0 0.0
    %289 = vmatprep.subr.mxu0 0.0
    %290 = vmatpush1.msra.mxu0 0.0
    %291 = vmatprep.subr.mxu0 0.0
    %292 = vmatpush1.msra.mxu0 0.0
    %293 = vmatprep.subr.mxu0 0.0
    %294 = vmatpush1.msra.mxu0 0.0
    %295 = vmatprep.subr.mxu0 0.0
    %296 = vmatpush1.msra.mxu0 0.0
    %297 = vmatprep.subr.mxu0 %v250
    %298 = vmatpush1.msra.mxu0 %v249
    %299 = vmatprep.subr.mxu0 %v247
    %300 = vmatpush1.msra.mxu0 %v246
    %301 = vmatprep.subr.mxu0 %v244
    %302 = vmatpush1.msra.mxu0 %v243
    %303 = vmatprep.subr.mxu0 %v241
    %304 = vmatpush1.msra.mxu0 %v240
    %305 = vmatprep.subr.mxu0 %v238
    %306 = vmatpush1.msra.mxu0 %v237
    %307 = vmatprep.subr.mxu0 %v235
    %308 = vmatpush1.msra.mxu0 %v234
    %309 = vmatprep.subr.mxu0 %v232
    %310 = vmatpush1.msra.mxu0 %v231
    %311 = vmatprep.subr.mxu0 %v229
    %312 = vmatpush1.msra.mxu0 %v228
    %313 = vmatprep.subr.mxu0 %v226
    %314 = vmatpush1.msra.mxu0 %v225
    %315 = vmatprep.subr.mxu0 0.0
    %316 = vmatpush2.msra.mxu0 0.0
    %317 = vmatprep.subr.mxu0 0.0
    %318 = vmatpush2.msra.mxu0 0.0
    %319 = vmatprep.subr.mxu0 0.0
    %320 = vmatpush2.msra.mxu0 0.0
    %321 = vmatprep.subr.mxu0 0.0
    %322 = vmatpush2.msra.mxu0 0.0
    %323 = vmatprep.subr.mxu0 0.0
    %324 = vmatpush2.msra.mxu0 0.0
    %325 = vmatprep.subr.mxu0 0.0
    %326 = vmatpush2.msra.mxu0 0.0
    %327 = vmatprep.subr.mxu0 0.0
    %328 = vmatpush2.msra.mxu0 0.0
    %329 = vmatprep.subr.mxu0 0.0
    %330 = vmatpush2.msra.mxu0 0.0
    %331 = vmatprep.subr.mxu0 0.0
    %332 = vmatpush2.msra.mxu0 0.0
    %333 = vmatprep.subr.mxu0 0.0
    %334 = vmatpush2.msra.mxu0 0.0
    %335 = vmatprep.subr.mxu0 0.0
    %336 = vmatpush2.msra.mxu0 0.0
    %337 = vmatprep.subr.mxu0 0.0
    %338 = vmatpush2.msra.mxu0 0.0
    %339 = vmatprep.subr.mxu0 0.0
    %340 = vmatpush2.msra.mxu0 0.0
    %341 = vmatprep.subr.mxu0 0.0
    %342 = vmatpush2.msra.mxu0 0.0
    %343 = vmatprep.subr.mxu0 0.0
    %344 = vmatpush2.msra.mxu0 0.0
    %345 = vmatprep.subr.mxu0 0.0
    %346 = vmatpush2.msra.mxu0 0.0
    %347 = vmatprep.mubr.f32.mxu0 0.0
    %348 = vmatmul.mubr.f32.gmra.mxu0 %v281
    %v349 = vpop.f32.mrf.mxu0
    %v350 = vadd.f32 %v150, %v349
    %v351 = vpop.f32.mrf.mxu0
    %v352 = vadd.f32 %v150, %v351
    %353 = vdwg.mxu0
    %354 = vmatprep.subr.mxu0 0.0
    %355 = vmatpush1.msra.mxu0 0.0
    %356 = vmatprep.subr.mxu0 0.0
    %357 = vmatpush1.msra.mxu0 0.0
    %358 = vmatprep.subr.mxu0 0.0
    %359 = vmatpush1.msra.mxu0 0.0
    %360 = vmatprep.subr.mxu0 0.0
    %361 = vmatpush1.msra.mxu0 0.0
    %362 = vmatprep.subr.mxu0 0.0
    %363 = vmatpush1.msra.mxu0 0.0
    %364 = vmatprep.subr.mxu0 0.0
    %365 = vmatpush1.msra.mxu0 0.0
    %366 = vmatprep.subr.mxu0 0.0
    %367 = vmatpush1.msra.mxu0 0.0
    %368 = vmatprep.subr.mxu0 0.0
    %369 = vmatpush1.msra.mxu0 %v251
    %370 = vmatprep.subr.mxu0 0.0
    %371 = vmatpush1.msra.mxu0 %v248
    %372 = vmatprep.subr.mxu0 0.0
    %373 = vmatpush1.msra.mxu0 %v245
    %374 = vmatprep.subr.mxu0 0.0
    %375 = vmatpush1.msra.mxu0 %v242
    %376 = vmatprep.subr.mxu0 0.0
    %377 = vmatpush1.msra.mxu0 %v239
    %378 = vmatprep.subr.mxu0 0.0
    %379 = vmatpush1.msra.mxu0 %v236
    %380 = vmatprep.subr.mxu0 0.0
    %381 = vmatpush1.msra.mxu0 %v233
    %382 = vmatprep.subr.mxu0 0.0
    %383 = vmatpush1.msra.mxu0 %v230
    %384 = vmatprep.subr.mxu0 0.0
    %385 = vmatpush1.msra.mxu0 %v227
    %386 = vmatprep.subr.mxu0 0.0
    %387 = vmatpush2.msra.mxu0 0.0
    %388 = vmatprep.subr.mxu0 0.0
    %389 = vmatpush2.msra.mxu0 0.0
    %390 = vmatprep.subr.mxu0 0.0
    %391 = vmatpush2.msra.mxu0 0.0
    %392 = vmatprep.subr.mxu0 0.0
    %393 = vmatpush2.msra.mxu0 0.0
    %394 = vmatprep.subr.mxu0 0.0
    %395 = vmatpush2.msra.mxu0 0.0
    %396 = vmatprep.subr.mxu0 0.0
    %397 = vmatpush2.msra.mxu0 0.0
    %398 = vmatprep.subr.mxu0 0.0
    %399 = vmatpush2.msra.mxu0 0.0
    %400 = vmatprep.subr.mxu0 0.0
    %401 = vmatpush2.msra.mxu0 0.0
    %402 = vmatprep.subr.mxu0 0.0
    %403 = vmatpush2.msra.mxu0 0.0
    %404 = vmatprep.subr.mxu0 0.0
    %405 = vmatpush2.msra.mxu0 0.0
    %406 = vmatprep.subr.mxu0 0.0
    %407 = vmatpush2.msra.mxu0 0.0
    %408 = vmatprep.subr.mxu0 0.0
    %409 = vmatpush2.msra.mxu0 0.0
    %410 = vmatprep.subr.mxu0 0.0
    %411 = vmatpush2.msra.mxu0 0.0
    %412 = vmatprep.subr.mxu0 0.0
    %413 = vmatpush2.msra.mxu0 0.0
    %414 = vmatprep.subr.mxu0 0.0
    %415 = vmatpush2.msra.mxu0 0.0
    %416 = vmatprep.subr.mxu0 0.0
    %417 = vmatpush2.msra.mxu0 0.0
    %418 = vmatprep.mubr.f32.mxu0 0.0
    %419 = vmatmul.mubr.f32.gmra.mxu0 %v281
    %v420 = vpop.f32.mrf.mxu0
    %v421 = vadd.f32 %v150, %v420
    %v422 = vpop.f32.mrf.mxu0
    %423 = vdwg.mxu0
    %v424 = vmax.f32 %v350, 0.0
    %v425 = vmax.f32 %v352, 0.0
    %v426 = vmax.f32 %v421, 0.0
    %v427 = vld [vmem:[%s5] sm:$0x7]
    %v429 = vlaneseq
    %v430 = vshrl.u32 %v429, 7
    %v431 = vsub.s32 0, %v430
    %v432 = vrot.slane %v427, %v431
    %v433 = vlaneseq
    %v434 = vshrl.u32 %v433, 7
    %v435 = vsub.s32 1, %v434
    %v436 = vrot.slane %v427, %v435
    %v437 = vlaneseq
    %v438 = vshrl.u32 %v437, 7
    %v439 = vsub.s32 2, %v438
    %v440 = vrot.slane %v427, %v439
    %v444 = vmul.f32 %v424, %v432
    %v445 = vmul.f32 %v425, %v436
    %v446 = vmul.f32 %v426, %v440
    %447 = vst [vmem:[#allocation2] sm:$0xff] 0.0
    %448 = vst [vmem:[#allocation2 + $0x8] sm:$0xff] 0.0
    %449 = vst [vmem:[#allocation2 + $0x10] sm:$0xff] 0.0
    %450 = vst [vmem:[#allocation2 + $0x18] sm:$0xff] 0.0
    %451 = vst [vmem:[#allocation2 + $0x20] sm:$0xff] 0.0
    %452 = vst [vmem:[#allocation2 + $0x8] sm:$0xff] %v444
    %453 = vst [vmem:[#allocation2 + $0x10] sm:$0xff] %v445
    %454 = vst [vmem:[#allocation2 + $0x18] sm:$0xff] %v446
    %v455 = vld [vmem:[#allocation2] sm:$0xff]
    %v456 = vld [vmem:[#allocation2 + $0x8] sm:$0xff]
    %v457 = vld [vmem:[#allocation2 + $0x10] sm:$0xff]
    %v458 = vld [vmem:[#allocation2 + $0x18] sm:$0xff]
    %v459 = vld [vmem:[#allocation2 + $0x8] sm:$0xff]
    %v460 = vld [vmem:[#allocation2 + $0x10] sm:$0xff]
    %v461 = vld [vmem:[#allocation2 + $0x18] sm:$0xff]
    %v462 = vld [vmem:[#allocation2 + $0x20] sm:$0xff]
    %467 = vrot.lane.b32.xlu0 %v455, 127
    %v468 = vpop.permute.xlu0 %467
    %469 = vrot.lane.b32.xlu0 %v456, 127
    %v470 = vpop.permute.xlu0 %469
    %471 = vrot.lane.b32.xlu0 %v457, 127
    %v472 = vpop.permute.xlu0 %471
    %473 = vrot.lane.b32.xlu0 %v458, 127
    %v474 = vpop.permute.xlu0 %473
    %v475 = vsel %vm56, %v468, %v470
    %v476 = vsel %vm56, %v470, %v472
    %v477 = vsel %vm56, %v472, %v474
    %478 = vrot.lane.b32.xlu0 %v455, 126
    %v479 = vpop.permute.xlu0 %478
    %480 = vrot.lane.b32.xlu0 %v456, 126
    %v481 = vpop.permute.xlu0 %480
    %482 = vrot.lane.b32.xlu0 %v457, 126
    %v483 = vpop.permute.xlu0 %482
    %484 = vrot.lane.b32.xlu0 %v458, 126
    %v485 = vpop.permute.xlu0 %484
    %v486 = vsel %vm68, %v479, %v481
    %v487 = vsel %vm68, %v481, %v483
    %v488 = vsel %vm68, %v483, %v485
    %489 = vrot.lane.b32.xlu0 %v455, 110
    %v490 = vpop.permute.xlu0 %489
    %491 = vrot.lane.b32.xlu0 %v456, 110
    %v492 = vpop.permute.xlu0 %491
    %493 = vrot.lane.b32.xlu0 %v457, 110
    %v494 = vpop.permute.xlu0 %493
    %495 = vrot.lane.b32.xlu0 %v458, 110
    %v496 = vpop.permute.xlu0 %495
    %v497 = vsel %vm80, %v490, %v492
    %v498 = vsel %vm80, %v492, %v494
    %v499 = vsel %vm80, %v494, %v496
    %500 = vrot.lane.b32.xlu0 %v456, 109
    %v501 = vpop.permute.xlu0 %500
    %502 = vrot.lane.b32.xlu0 %v457, 109
    %v503 = vpop.permute.xlu0 %502
    %504 = vrot.lane.b32.xlu0 %v458, 109
    %v505 = vpop.permute.xlu0 %504
    %v506 = vsel %vm90, %v501, %v503
    %v507 = vsel %vm90, %v503, %v505
    %512 = vrot.lane.b32.xlu0 %v459, 108
    %v513 = vpop.permute.xlu0 %512
    %514 = vrot.lane.b32.xlu0 %v460, 108
    %v515 = vpop.permute.xlu0 %514
    %516 = vrot.lane.b32.xlu0 %v461, 108
    %v517 = vpop.permute.xlu0 %516
    %518 = vrot.lane.b32.xlu0 %v462, 108
    %v519 = vpop.permute.xlu0 %518
    %v520 = vsel %vm105, %v513, %v515
    %v521 = vsel %vm105, %v515, %v517
    %v522 = vsel %vm105, %v517, %v519
    %523 = vrot.lane.b32.xlu0 %v459, 92
    %v524 = vpop.permute.xlu0 %523
    %525 = vrot.lane.b32.xlu0 %v460, 92
    %v526 = vpop.permute.xlu0 %525
    %527 = vrot.lane.b32.xlu0 %v461, 92
    %v528 = vpop.permute.xlu0 %527
    %529 = vrot.lane.b32.xlu0 %v462, 92
    %v530 = vpop.permute.xlu0 %529
    %v531 = vsel %vm117, %v524, %v526
    %v532 = vsel %vm117, %v526, %v528
    %v533 = vsel %vm117, %v528, %v530
    %534 = vrot.lane.b32.xlu0 %v459, 91
    %v535 = vpop.permute.xlu0 %534
    %536 = vrot.lane.b32.xlu0 %v460, 91
    %v537 = vpop.permute.xlu0 %536
    %538 = vrot.lane.b32.xlu0 %v461, 91
    %v539 = vpop.permute.xlu0 %538
    %540 = vrot.lane.b32.xlu0 %v462, 91
    %v541 = vpop.permute.xlu0 %540
    %v542 = vsel %vm129, %v535, %v537
    %v543 = vsel %vm129, %v537, %v539
    %v544 = vsel %vm129, %v539, %v541
    %545 = vrot.lane.b32.xlu0 %v459, 90
    %v546 = vpop.permute.xlu0 %545
    %547 = vrot.lane.b32.xlu0 %v460, 90
    %v548 = vpop.permute.xlu0 %547
    %549 = vrot.lane.b32.xlu0 %v461, 90
    %v550 = vpop.permute.xlu0 %549
    %551 = vrot.lane.b32.xlu0 %v462, 90
    %v552 = vpop.permute.xlu0 %551
    %v553 = vsel %vm141, %v546, %v548
    %v554 = vsel %vm141, %v548, %v550
    %v555 = vsel %vm141, %v550, %v552
    %v556 = vld [vmem:[%s3] sm:$0xff]
    %v557 = vld [vmem:[%s4] sm:$0xff]
    %559 = vset.pattern.permute.xlu0 0
    %560 = vperm.xlu0 %559, %v557
    %v561 = vpop.permute.xlu0 %560
    %563 = vrot.lane.b32.xlu0 %v455, 19
    %v564 = vpop.permute.xlu0 %563
    %565 = vrot.lane.b32.xlu0 %v456, 19
    %v566 = vpop.permute.xlu0 %565
    %567 = vrot.lane.b32.xlu0 %v457, 19
    %v568 = vpop.permute.xlu0 %567
    %569 = vrot.lane.b32.xlu0 %v458, 19
    %v570 = vpop.permute.xlu0 %569
    %571 = vrot.lane.b32.xlu0 %v475, 19
    %v572 = vpop.permute.xlu0 %571
    %573 = vrot.lane.b32.xlu0 %v476, 19
    %v574 = vpop.permute.xlu0 %573
    %575 = vrot.lane.b32.xlu0 %v477, 19
    %v576 = vpop.permute.xlu0 %575
    %577 = vrot.lane.b32.xlu0 %v474, 19
    %v578 = vpop.permute.xlu0 %577
    %579 = vrot.lane.b32.xlu0 %v486, 19
    %v580 = vpop.permute.xlu0 %579
    %581 = vrot.lane.b32.xlu0 %v487, 19
    %v582 = vpop.permute.xlu0 %581
    %583 = vrot.lane.b32.xlu0 %v488, 19
    %v584 = vpop.permute.xlu0 %583
    %585 = vrot.lane.b32.xlu0 %v485, 19
    %v586 = vpop.permute.xlu0 %585
    %587 = vrot.lane.b32.xlu0 %v497, 19
    %v588 = vpop.permute.xlu0 %587
    %589 = vrot.lane.b32.xlu0 %v498, 19
    %v590 = vpop.permute.xlu0 %589
    %591 = vrot.lane.b32.xlu0 %v499, 19
    %v592 = vpop.permute.xlu0 %591
    %593 = vrot.lane.b32.xlu0 %v496, 19
    %v594 = vpop.permute.xlu0 %593
    %595 = vrot.lane.b32.xlu0 %v501, 19
    %v596 = vpop.permute.xlu0 %595
    %597 = vrot.lane.b32.xlu0 %v506, 19
    %v598 = vpop.permute.xlu0 %597
    %599 = vrot.lane.b32.xlu0 %v507, 19
    %v600 = vpop.permute.xlu0 %599
    %601 = vrot.lane.b32.xlu0 %v505, 19
    %v602 = vpop.permute.xlu0 %601
    %603 = vrot.lane.b32.xlu0 %v513, 19
    %v604 = vpop.permute.xlu0 %603
    %605 = vrot.lane.b32.xlu0 %v520, 19
    %v606 = vpop.permute.xlu0 %605
    %607 = vrot.lane.b32.xlu0 %v521, 19
    %v608 = vpop.permute.xlu0 %607
    %609 = vrot.lane.b32.xlu0 %v522, 19
    %v610 = vpop.permute.xlu0 %609
    %611 = vrot.lane.b32.xlu0 %v524, 19
    %v612 = vpop.permute.xlu0 %611
    %613 = vrot.lane.b32.xlu0 %v531, 19
    %v614 = vpop.permute.xlu0 %613
    %615 = vrot.lane.b32.xlu0 %v532, 19
    %v616 = vpop.permute.xlu0 %615
    %617 = vrot.lane.b32.xlu0 %v533, 19
    %v618 = vpop.permute.xlu0 %617
    %619 = vrot.lane.b32.xlu0 %v535, 19
    %v620 = vpop.permute.xlu0 %619
    %621 = vrot.lane.b32.xlu0 %v542, 19
    %v622 = vpop.permute.xlu0 %621
    %623 = vrot.lane.b32.xlu0 %v543, 19
    %v624 = vpop.permute.xlu0 %623
    %625 = vrot.lane.b32.xlu0 %v544, 19
    %v626 = vpop.permute.xlu0 %625
    %627 = vrot.lane.b32.xlu0 %v546, 19
    %v628 = vpop.permute.xlu0 %627
    %629 = vrot.lane.b32.xlu0 %v553, 19
    %v630 = vpop.permute.xlu0 %629
    %631 = vrot.lane.b32.xlu0 %v554, 19
    %v632 = vpop.permute.xlu0 %631
    %633 = vrot.lane.b32.xlu0 %v555, 19
    %v634 = vpop.permute.xlu0 %633
    %v635 = vsel %vm224, %v564, %v566
    %v636 = vsel %vm224, %v566, %v568
    %v637 = vsel %vm224, %v568, %v570
    %v638 = vsel %vm224, %v572, %v574
    %v639 = vsel %vm224, %v574, %v576
    %v640 = vsel %vm224, %v576, %v578
    %v641 = vsel %vm224, %v580, %v582
    %v642 = vsel %vm224, %v582, %v584
    %v643 = vsel %vm224, %v584, %v586
    %v644 = vsel %vm224, %v588, %v590
    %v645 = vsel %vm224, %v590, %v592
    %v646 = vsel %vm224, %v592, %v594
    %v647 = vsel %vm224, %v596, %v598
    %v648 = vsel %vm224, %v598, %v600
    %v649 = vsel %vm224, %v600, %v602
    %v650 = vsel %vm224, %v604, %v606
    %v651 = vsel %vm224, %v606, %v608
    %v652 = vsel %vm224, %v608, %v610
    %v653 = vsel %vm224, %v612, %v614
    %v654 = vsel %vm224, %v614, %v616
    %v655 = vsel %vm224, %v616, %v618
    %v656 = vsel %vm224, %v620, %v622
    %v657 = vsel %vm224, %v622, %v624
    %v658 = vsel %vm224, %v624, %v626
    %v659 = vsel %vm224, %v628, %v630
    %v660 = vsel %vm224, %v630, %v632
    %v661 = vsel %vm224, %v632, %v634
    %v690 = vsel %vm279, %v556, 0
    %692 = vmatprep.subr.mxu0 0.0
    %693 = vmatpush1.msra.mxu0 0.0
    %694 = vmatprep.subr.mxu0 0.0
    %695 = vmatpush1.msra.mxu0 0.0
    %696 = vmatprep.subr.mxu0 0.0
    %697 = vmatpush1.msra.mxu0 0.0
    %698 = vmatprep.subr.mxu0 0.0
    %699 = vmatpush1.msra.mxu0 0.0
    %700 = vmatprep.subr.mxu0 0.0
    %701 = vmatpush1.msra.mxu0 0.0
    %702 = vmatprep.subr.mxu0 0.0
    %703 = vmatpush1.msra.mxu0 0.0
    %704 = vmatprep.subr.mxu0 0.0
    %705 = vmatpush1.msra.mxu0 0.0
    %706 = vmatprep.subr.mxu0 %v660
    %707 = vmatpush1.msra.mxu0 %v659
    %708 = vmatprep.subr.mxu0 %v657
    %709 = vmatpush1.msra.mxu0 %v656
    %710 = vmatprep.subr.mxu0 %v654
    %711 = vmatpush1.msra.mxu0 %v653
    %712 = vmatprep.subr.mxu0 %v651
    %713 = vmatpush1.msra.mxu0 %v650
    %714 = vmatprep.subr.mxu0 %v648
    %715 = vmatpush1.msra.mxu0 %v647
    %716 = vmatprep.subr.mxu0 %v645
    %717 = vmatpush1.msra.mxu0 %v644
    %718 = vmatprep.subr.mxu0 %v642
    %719 = vmatpush1.msra.mxu0 %v641
    %720 = vmatprep.subr.mxu0 %v639
    %721 = vmatpush1.msra.mxu0 %v638
    %722 = vmatprep.subr.mxu0 %v636
    %723 = vmatpush1.msra.mxu0 %v635
    %724 = vmatprep.subr.mxu0 0.0
    %725 = vmatpush2.msra.mxu0 0.0
    %726 = vmatprep.subr.mxu0 0.0
    %727 = vmatpush2.msra.mxu0 0.0
    %728 = vmatprep.subr.mxu0 0.0
    %729 = vmatpush2.msra.mxu0 0.0
    %730 = vmatprep.subr.mxu0 0.0
    %731 = vmatpush2.msra.mxu0 0.0
    %732 = vmatprep.subr.mxu0 0.0
    %733 = vmatpush2.msra.mxu0 0.0
    %734 = vmatprep.subr.mxu0 0.0
    %735 = vmatpush2.msra.mxu0 0.0
    %736 = vmatprep.subr.mxu0 0.0
    %737 = vmatpush2.msra.mxu0 0.0
    %738 = vmatprep.subr.mxu0 0.0
    %739 = vmatpush2.msra.mxu0 0.0
    %740 = vmatprep.subr.mxu0 0.0
    %741 = vmatpush2.msra.mxu0 0.0
    %742 = vmatprep.subr.mxu0 0.0
    %743 = vmatpush2.msra.mxu0 0.0
    %744 = vmatprep.subr.mxu0 0.0
    %745 = vmatpush2.msra.mxu0 0.0
    %746 = vmatprep.subr.mxu0 0.0
    %747 = vmatpush2.msra.mxu0 0.0
    %748 = vmatprep.subr.mxu0 0.0
    %749 = vmatpush2.msra.mxu0 0.0
    %750 = vmatprep.subr.mxu0 0.0
    %751 = vmatpush2.msra.mxu0 0.0
    %752 = vmatprep.subr.mxu0 0.0
    %753 = vmatpush2.msra.mxu0 0.0
    %754 = vmatprep.subr.mxu0 0.0
    %755 = vmatpush2.msra.mxu0 0.0
    %756 = vmatprep.mubr.f32.mxu0 0.0
    %757 = vmatmul.mubr.f32.gmra.mxu0 %v690
    %v758 = vpop.f32.mrf.mxu0
    %v759 = vadd.f32 %v561, %v758
    %v760 = vpop.f32.mrf.mxu0
    %v761 = vadd.f32 %v561, %v760
    %762 = vdwg.mxu0
    %763 = vmatprep.subr.mxu0 0.0
    %764 = vmatpush1.msra.mxu0 0.0
    %765 = vmatprep.subr.mxu0 0.0
    %766 = vmatpush1.msra.mxu0 0.0
    %767 = vmatprep.subr.mxu0 0.0
    %768 = vmatpush1.msra.mxu0 0.0
    %769 = vmatprep.subr.mxu0 0.0
    %770 = vmatpush1.msra.mxu0 0.0
    %771 = vmatprep.subr.mxu0 0.0
    %772 = vmatpush1.msra.mxu0 0.0
    %773 = vmatprep.subr.mxu0 0.0
    %774 = vmatpush1.msra.mxu0 0.0
    %775 = vmatprep.subr.mxu0 0.0
    %776 = vmatpush1.msra.mxu0 0.0
    %777 = vmatprep.subr.mxu0 0.0
    %778 = vmatpush1.msra.mxu0 %v661
    %779 = vmatprep.subr.mxu0 0.0
    %780 = vmatpush1.msra.mxu0 %v658
    %781 = vmatprep.subr.mxu0 0.0
    %782 = vmatpush1.msra.mxu0 %v655
    %783 = vmatprep.subr.mxu0 0.0
    %784 = vmatpush1.msra.mxu0 %v652
    %785 = vmatprep.subr.mxu0 0.0
    %786 = vmatpush1.msra.mxu0 %v649
    %787 = vmatprep.subr.mxu0 0.0
    %788 = vmatpush1.msra.mxu0 %v646
    %789 = vmatprep.subr.mxu0 0.0
    %790 = vmatpush1.msra.mxu0 %v643
    %791 = vmatprep.subr.mxu0 0.0
    %792 = vmatpush1.msra.mxu0 %v640
    %793 = vmatprep.subr.mxu0 0.0
    %794 = vmatpush1.msra.mxu0 %v637
    %795 = vmatprep.subr.mxu0 0.0
    %796 = vmatpush2.msra.mxu0 0.0
    %797 = vmatprep.subr.mxu0 0.0
    %798 = vmatpush2.msra.mxu0 0.0
    %799 = vmatprep.subr.mxu0 0.0
    %800 = vmatpush2.msra.mxu0 0.0
    %801 = vmatprep.subr.mxu0 0.0
    %802 = vmatpush2.msra.mxu0 0.0
    %803 = vmatprep.subr.mxu0 0.0
    %804 = vmatpush2.msra.mxu0 0.0
    %805 = vmatprep.subr.mxu0 0.0
    %806 = vmatpush2.msra.mxu0 0.0
    %807 = vmatprep.subr.mxu0 0.0
    %808 = vmatpush2.msra.mxu0 0.0
    %809 = vmatprep.subr.mxu0 0.0
    %810 = vmatpush2.msra.mxu0 0.0
    %811 = vmatprep.subr.mxu0 0.0
    %812 = vmatpush2.msra.mxu0 0.0
    %813 = vmatprep.subr.mxu0 0.0
    %814 = vmatpush2.msra.mxu0 0.0
    %815 = vmatprep.subr.mxu0 0.0
    %816 = vmatpush2.msra.mxu0 0.0
    %817 = vmatprep.subr.mxu0 0.0
    %818 = vmatpush2.msra.mxu0 0.0
    %819 = vmatprep.subr.mxu0 0.0
    %820 = vmatpush2.msra.mxu0 0.0
    %821 = vmatprep.subr.mxu0 0.0
    %822 = vmatpush2.msra.mxu0 0.0
    %823 = vmatprep.subr.mxu0 0.0
    %824 = vmatpush2.msra.mxu0 0.0
    %825 = vmatprep.subr.mxu0 0.0
    %826 = vmatpush2.msra.mxu0 0.0
    %827 = vmatprep.mubr.f32.mxu0 0.0
    %828 = vmatmul.mubr.f32.gmra.mxu0 %v690
    %v829 = vpop.f32.mrf.mxu0
    %v830 = vadd.f32 %v561, %v829
    %v831 = vpop.f32.mrf.mxu0
    %832 = vdwg.mxu0
    %v833 = vld [vmem:[#allocation3 + $0x8] sm:$0xff]
    %v834 = vld [vmem:[#allocation3 + $0x10] sm:$0xff]
    %v835 = vld [vmem:[#allocation3 + $0x18] sm:$0xff]
    %v836 = vadd.f32 %v833, %v759
    %v837 = vadd.f32 %v834, %v761
    %v838 = vadd.f32 %v835, %v830
    %v839 = vmax.f32 %v836, 0.0
    %v840 = vmax.f32 %v837, 0.0
    %v841 = vmax.f32 %v838, 0.0
    %842 = vst [vmem:[#allocation6] sm:$0xff] %v839
    %843 = vst [vmem:[#allocation6 + $0x8] sm:$0xff] %v840
    %844 = vst [vmem:[#allocation6 + $0x10] sm:$0xff] %v841
    // Predicated region
    $region30: #{tpu_custom_call.1} parent=1 // pred_check
      _
    $region31: #{tpu_custom_call.1} parent=1 // pred_check_branch
      %846 = sbr.rel (0) target = $region33
    $region32: #{tpu_custom_call.1} parent=1 // pred_region
      %s848 = ssub.s32 384, 384
      %849 = vsyncadd [#allocation5], %s848
      %s851 = sshll.u32 [#allocation6], 4
      %s852 = int_to_ptr.vmem [resolvable:$true] %s851
      %854 = dma.vmem_to_hbm [thread:$0]  %s852, 384, %s6, [#allocation5]
    $region33: #{tpu_custom_call.1} parent=1 // pred_fallthru
      _
    // Predicated region
    $region34: #{tpu_custom_call.1} parent=1 // pred_check
      _
    $region35: #{tpu_custom_call.1} parent=1 // pred_check_branch
      %856 = sbr.rel (0) target = $region37
    $region36: #{tpu_custom_call.1} parent=1 // pred_region
      %857 = dma.done [#allocation5], 384
    $region37: #{tpu_custom_call.1} parent=1 // pred_fallthru
      _
    %858 = vsyncpa [#allocation4], 1
    %859 = vsyncpa [#allocation5], 1

</llo_original>
